<compile_context>
chip_gen: v7x
topology: tpu7x:2x2x1
jax: 0.10.0
libtpu: 0.0.40
codegen_flags: <defaults>
</compile_context>

<pallas_src>
import functools

import jax
import jax.numpy as jnp
from jax.experimental import pallas as pl
from jax.experimental.pallas import tpu as pltpu


def _intervention_kernel(adj_ref, x_ref, w1_ref, b1_ref, w2_ref, b2_ref,
                         out_ref, *, max_steps, causal_dim):
    """Single invocation: all max_steps propagation iterations run on
    VMEM-resident tiles for the entire (flattened) batch."""
    D = causal_dim
    x = x_ref[...]                       # [BV, D]   (batch*num_vars, causal_dim)
    adj = adj_ref[...]                   # [BV, BV]  block-diagonal adjacency
    w1 = w1_ref[...]                     # [D, 2D]   = [W1a | W1b]
    w2 = w2_ref[...]                     # [D, D]
    BV = x.shape[0]

    # Hoist bias broadcasts out of the unrolled loop (no CSE on broadcast_in_dim).
    b1 = jnp.broadcast_to(b1_ref[...], (BV, D))
    b2 = jnp.broadcast_to(b2_ref[...], (BV, D))

    for _ in range(max_steps):
        # concat([x, adj@x], -1) @ W1  ==  x @ W1a  +  (adj@x) @ W1b
        #                              ==  x @ W1a  +  adj @ (x @ W1b)
        # Fused as one fat dot x @ [W1a|W1b] (N=2D lanes), then one adj push.
        xw = jnp.dot(x, w1, preferred_element_type=jnp.float32)        # [BV, 2D]
        h = (xw[:, :D]
             + jnp.dot(adj, xw[:, D:], preferred_element_type=jnp.float32)
             + b1)
        h = jnp.maximum(h, 0.0)                                         # ReLU
        x = jnp.dot(h, w2, preferred_element_type=jnp.float32) + b2     # [BV, D]

    # TODO(synk): at D=32 the final store is a masked vst (lane width < 128);
    # a lane-dense [B, V*D] store needs an in-kernel relayout that Mosaic may
    # reject at these shapes, so we keep the flat [BV, D] store.
    out_ref[...] = x.astype(out_ref.dtype)


def intervention_effect(causal_vars, adj_matrix, intervention_idx,
                        intervention_value, params, *, max_steps=3):
    B, V, D = causal_vars.shape
    w1, b1, w2, b2 = params          # w1: [2D, D], b1: [D], w2: [D, D], b2: [D]
    BV = B * V

    # intervened_vars[:, intervention_idx] = intervention_value   (glue)
    intervened = causal_vars.at[:, intervention_idx, :].set(intervention_value)
    x2d = intervened.reshape(BV, D)

    # Block-diagonal adjacency: applies adj independently to each batch element
    # with a single MXU push per propagation step.
    adj_block = jnp.kron(jnp.eye(B, dtype=adj_matrix.dtype), adj_matrix)  # [BV, BV]

    # Fuse the two halves of W1 so x @ W1cat yields [x@W1a | x@W1b] in one dot.
    w1cat = jnp.concatenate([w1[:D, :], w1[D:, :]], axis=1)               # [D, 2D]
    b1r = b1.reshape(1, D)
    b2r = b2.reshape(1, D)

    kernel = functools.partial(_intervention_kernel,
                               max_steps=max_steps, causal_dim=D)

    out2d = pl.pallas_call(
        kernel,
        out_shape=jax.ShapeDtypeStruct((BV, D), causal_vars.dtype),
        grid_spec=pltpu.PrefetchScalarGridSpec(
            num_scalar_prefetch=0,
            grid=(1,),                                   # single invocation
            in_specs=[
                pl.BlockSpec((BV, BV), lambda i: (0, 0)),   # block-diag adj
                pl.BlockSpec((BV, D), lambda i: (0, 0)),    # x, whole batch
                pl.BlockSpec((D, 2 * D), lambda i: (0, 0)),  # W1cat
                pl.BlockSpec((1, D), lambda i: (0, 0)),      # b1
                pl.BlockSpec((D, D), lambda i: (0, 0)),      # W2
                pl.BlockSpec((1, D), lambda i: (0, 0)),      # b2
            ],
            out_specs=pl.BlockSpec((BV, D), lambda i: (0, 0)),
        ),
        compiler_params=pltpu.CompilerParams(
            dimension_semantics=("arbitrary",)),
    )(adj_block, x2d, w1cat, b1r, w2, b2r)

    return out2d.reshape(B, V, D)


def _init_params(key, causal_dim):
    """Deterministic init mimicking nn.Linear default (U[-1/sqrt(fan_in), +])."""
    D = causal_dim
    k1, k2, k3, k4 = jax.random.split(key, 4)
    bound1 = 1.0 / jnp.sqrt(2.0 * D)
    bound2 = 1.0 / jnp.sqrt(float(D))
    w1 = jax.random.uniform(k1, (2 * D, D), jnp.float32, -bound1, bound1)  # [in, out]
    b1 = jax.random.uniform(k2, (D,), jnp.float32, -bound1, bound1)
    w2 = jax.random.uniform(k3, (D, D), jnp.float32, -bound2, bound2)
    b2 = jax.random.uniform(k4, (D,), jnp.float32, -bound2, bound2)
    return w1, b1, w2, b2


def _reference(causal_vars, adj_matrix, intervention_idx, intervention_value,
               params, max_steps=3):
    """Pure-JAX reference mirroring the PyTorch forward."""
    w1, b1, w2, b2 = params
    x = causal_vars.at[:, intervention_idx, :].set(intervention_value)
    for _ in range(max_steps):
        eff = jnp.einsum('vw,bwd->bvd', adj_matrix, x)
        cat = jnp.concatenate([x, eff], axis=-1)
        h = jnp.maximum(cat @ w1 + b1, 0.0)
        x = h @ w2 + b2
    return x


if __name__ == "__main__":
    B, V, D = 2, 8, 32          # batch, num_vars, causal_dim
    intervention_idx = 3
    max_steps = 3

    key = jax.random.PRNGKey(0)
    k_vars, k_adj, k_int, k_par = jax.random.split(key, 4)

    causal_vars = jax.random.normal(k_vars, (B, V, D), jnp.float32)
    adj_matrix = jax.random.uniform(k_adj, (V, V), jnp.float32)
    intervention_value = jax.random.normal(k_int, (B, D), jnp.float32)
    params = _init_params(k_par, D)

    out = intervention_effect(causal_vars, adj_matrix, intervention_idx,
                              intervention_value, params, max_steps=max_steps)
    out = jax.block_until_ready(out)

    ref = _reference(causal_vars, adj_matrix, intervention_idx,
                     intervention_value, params, max_steps=max_steps)
    assert out.shape == (B, V, D)
    assert jnp.allclose(out, ref, atol=1e-4, rtol=1e-4), "mismatch vs reference"

    print("KERNEL_OK")
</pallas_src>

<mosaic_0001>
module attributes {stable_mosaic.version = 11 : i64} {
  func.func @_intervention_kernel(%arg0: i32, %arg1: memref<16x16xf32, #tpu.memory_space<vmem>>, %arg2: memref<16x32xf32, #tpu.memory_space<vmem>>, %arg3: memref<32x64xf32, #tpu.memory_space<vmem>>, %arg4: memref<1x32xf32, #tpu.memory_space<vmem>>, %arg5: memref<32x32xf32, #tpu.memory_space<vmem>>, %arg6: memref<1x32xf32, #tpu.memory_space<vmem>>, %arg7: memref<16x32xf32, #tpu.memory_space<vmem>>) attributes {dimension_semantics = [#tpu.dimension_semantics<arbitrary>], iteration_bounds = array<i64: 1>, scalar_prefetch = 0 : i64, scratch_operands = 0 : i64, tpu.core_type = #tpu.core_type<tc>, window_params = [{pipeline_mode = #tpu.pipeline_mode<synchronous>, transform_indices = @transform_0, window_bounds = array<i64: 16, 16>}, {pipeline_mode = #tpu.pipeline_mode<synchronous>, transform_indices = @transform_1, window_bounds = array<i64: 16, 32>}, {pipeline_mode = #tpu.pipeline_mode<synchronous>, transform_indices = @transform_2, window_bounds = array<i64: 32, 64>}, {pipeline_mode = #tpu.pipeline_mode<synchronous>, transform_indices = @transform_3, window_bounds = array<i64: 1, 32>}, {pipeline_mode = #tpu.pipeline_mode<synchronous>, transform_indices = @transform_4, window_bounds = array<i64: 32, 32>}, {pipeline_mode = #tpu.pipeline_mode<synchronous>, transform_indices = @transform_5, window_bounds = array<i64: 1, 32>}, {pipeline_mode = #tpu.pipeline_mode<synchronous>, transform_indices = @transform_6, window_bounds = array<i64: 16, 32>}]} {
    %c0 = arith.constant 0 : index
    %c0_0 = arith.constant 0 : index
    %0 = vector.load %arg2[%c0, %c0_0] : memref<16x32xf32, #tpu.memory_space<vmem>>, vector<16x32xf32>
    %c0_1 = arith.constant 0 : index
    %c0_2 = arith.constant 0 : index
    %1 = vector.load %arg1[%c0_1, %c0_2] : memref<16x16xf32, #tpu.memory_space<vmem>>, vector<16x16xf32>
    %c0_3 = arith.constant 0 : index
    %c0_4 = arith.constant 0 : index
    %2 = vector.load %arg3[%c0_3, %c0_4] : memref<32x64xf32, #tpu.memory_space<vmem>>, vector<32x64xf32>
    %c0_5 = arith.constant 0 : index
    %c0_6 = arith.constant 0 : index
    %3 = vector.load %arg5[%c0_5, %c0_6] : memref<32x32xf32, #tpu.memory_space<vmem>>, vector<32x32xf32>
    %c0_7 = arith.constant 0 : index
    %c0_8 = arith.constant 0 : index
    %4 = vector.load %arg4[%c0_7, %c0_8] : memref<1x32xf32, #tpu.memory_space<vmem>>, vector<1x32xf32>
    %5 = vector.shape_cast %4 : vector<1x32xf32> to vector<1x32xf32>
    %6 = vector.broadcast %5 : vector<1x32xf32> to vector<16x32xf32>
    %c0_9 = arith.constant 0 : index
    %c0_10 = arith.constant 0 : index
    %7 = vector.load %arg6[%c0_9, %c0_10] : memref<1x32xf32, #tpu.memory_space<vmem>>, vector<1x32xf32>
    %8 = vector.shape_cast %7 : vector<1x32xf32> to vector<1x32xf32>
    %9 = vector.broadcast %8 : vector<1x32xf32> to vector<16x32xf32>
    %cst = arith.constant dense<0.000000e+00> : vector<16x64xf32>
    %10 = tpu.matmul %0, %2, %cst {dimension_numbers = #tpu.dot_dimension_numbers<[1], [0], [0], [1], [0, 0, 1, 1], [], []>} : vector<16x32xf32>, vector<32x64xf32>, vector<16x64xf32> -> vector<16x64xf32>
    %11 = vector.extract_strided_slice %10 {offsets = [0, 0], sizes = [16, 32], strides = [1, 1]} : vector<16x64xf32> to vector<16x32xf32>
    %12 = vector.extract_strided_slice %10 {offsets = [0, 32], sizes = [16, 32], strides = [1, 1]} : vector<16x64xf32> to vector<16x32xf32>
    %cst_11 = arith.constant dense<0.000000e+00> : vector<16x32xf32>
    %13 = tpu.matmul %1, %12, %cst_11 {dimension_numbers = #tpu.dot_dimension_numbers<[1], [0], [0], [1], [0, 0, 1, 1], [], []>} : vector<16x16xf32>, vector<16x32xf32>, vector<16x32xf32> -> vector<16x32xf32>
    %14 = arith.addf %11, %13 : vector<16x32xf32>
    %15 = arith.addf %14, %6 : vector<16x32xf32>
    %cst_12 = arith.constant 0.000000e+00 : f32
    %16 = vector.broadcast %cst_12 : f32 to vector<16x32xf32>
    %17 = arith.maximumf %15, %16 : vector<16x32xf32>
    %cst_13 = arith.constant dense<0.000000e+00> : vector<16x32xf32>
    %18 = tpu.matmul %17, %3, %cst_13 {dimension_numbers = #tpu.dot_dimension_numbers<[1], [0], [0], [1], [0, 0, 1, 1], [], []>} : vector<16x32xf32>, vector<32x32xf32>, vector<16x32xf32> -> vector<16x32xf32>
    %19 = arith.addf %18, %9 : vector<16x32xf32>
    %cst_14 = arith.constant dense<0.000000e+00> : vector<16x64xf32>
    %20 = tpu.matmul %19, %2, %cst_14 {dimension_numbers = #tpu.dot_dimension_numbers<[1], [0], [0], [1], [0, 0, 1, 1], [], []>} : vector<16x32xf32>, vector<32x64xf32>, vector<16x64xf32> -> vector<16x64xf32>
    %21 = vector.extract_strided_slice %20 {offsets = [0, 0], sizes = [16, 32], strides = [1, 1]} : vector<16x64xf32> to vector<16x32xf32>
    %22 = vector.extract_strided_slice %20 {offsets = [0, 32], sizes = [16, 32], strides = [1, 1]} : vector<16x64xf32> to vector<16x32xf32>
    %cst_15 = arith.constant dense<0.000000e+00> : vector<16x32xf32>
    %23 = tpu.matmul %1, %22, %cst_15 {dimension_numbers = #tpu.dot_dimension_numbers<[1], [0], [0], [1], [0, 0, 1, 1], [], []>} : vector<16x16xf32>, vector<16x32xf32>, vector<16x32xf32> -> vector<16x32xf32>
    %24 = arith.addf %21, %23 : vector<16x32xf32>
    %25 = arith.addf %24, %6 : vector<16x32xf32>
    %cst_16 = arith.constant 0.000000e+00 : f32
    %26 = vector.broadcast %cst_16 : f32 to vector<16x32xf32>
    %27 = arith.maximumf %25, %26 : vector<16x32xf32>
    %cst_17 = arith.constant dense<0.000000e+00> : vector<16x32xf32>
    %28 = tpu.matmul %27, %3, %cst_17 {dimension_numbers = #tpu.dot_dimension_numbers<[1], [0], [0], [1], [0, 0, 1, 1], [], []>} : vector<16x32xf32>, vector<32x32xf32>, vector<16x32xf32> -> vector<16x32xf32>
    %29 = arith.addf %28, %9 : vector<16x32xf32>
    %cst_18 = arith.constant dense<0.000000e+00> : vector<16x64xf32>
    %30 = tpu.matmul %29, %2, %cst_18 {dimension_numbers = #tpu.dot_dimension_numbers<[1], [0], [0], [1], [0, 0, 1, 1], [], []>} : vector<16x32xf32>, vector<32x64xf32>, vector<16x64xf32> -> vector<16x64xf32>
    %31 = vector.extract_strided_slice %30 {offsets = [0, 0], sizes = [16, 32], strides = [1, 1]} : vector<16x64xf32> to vector<16x32xf32>
    %32 = vector.extract_strided_slice %30 {offsets = [0, 32], sizes = [16, 32], strides = [1, 1]} : vector<16x64xf32> to vector<16x32xf32>
    %cst_19 = arith.constant dense<0.000000e+00> : vector<16x32xf32>
    %33 = tpu.matmul %1, %32, %cst_19 {dimension_numbers = #tpu.dot_dimension_numbers<[1], [0], [0], [1], [0, 0, 1, 1], [], []>} : vector<16x16xf32>, vector<16x32xf32>, vector<16x32xf32> -> vector<16x32xf32>
    %34 = arith.addf %31, %33 : vector<16x32xf32>
    %35 = arith.addf %34, %6 : vector<16x32xf32>
    %cst_20 = arith.constant 0.000000e+00 : f32
    %36 = vector.broadcast %cst_20 : f32 to vector<16x32xf32>
    %37 = arith.maximumf %35, %36 : vector<16x32xf32>
    %cst_21 = arith.constant dense<0.000000e+00> : vector<16x32xf32>
    %38 = tpu.matmul %37, %3, %cst_21 {dimension_numbers = #tpu.dot_dimension_numbers<[1], [0], [0], [1], [0, 0, 1, 1], [], []>} : vector<16x32xf32>, vector<32x32xf32>, vector<16x32xf32> -> vector<16x32xf32>
    %39 = arith.addf %38, %9 : vector<16x32xf32>
    %c0_22 = arith.constant 0 : index
    %c0_23 = arith.constant 0 : index
    %40 = vector.load %arg7[%c0_22, %c0_23] : memref<16x32xf32, #tpu.memory_space<vmem>>, vector<16x32xf32>
    tpu.vector_store %arg7[%c0_22, %c0_23], %39 {strides = array<i32>} : memref<16x32xf32, #tpu.memory_space<vmem>>, vector<16x32xf32>,
    return
  }
  func.func @transform_0(%arg0: i32) -> (i32, i32) {
    %c0_i32 = arith.constant 0 : i32
    %c0_i32_0 = arith.constant 0 : i32
    %c0_i32_1 = arith.constant 0 : i32
    return %c0_i32, %c0_i32_0 : i32, i32
  }
  func.func @transform_1(%arg0: i32) -> (i32, i32) {
    %c0_i32 = arith.constant 0 : i32
    %c0_i32_0 = arith.constant 0 : i32
    %c0_i32_1 = arith.constant 0 : i32
    return %c0_i32, %c0_i32_0 : i32, i32
  }
  func.func @transform_2(%arg0: i32) -> (i32, i32) {
    %c0_i32 = arith.constant 0 : i32
    %c0_i32_0 = arith.constant 0 : i32
    %c0_i32_1 = arith.constant 0 : i32
    return %c0_i32, %c0_i32_0 : i32, i32
  }
  func.func @transform_3(%arg0: i32) -> (i32, i32) {
    %c0_i32 = arith.constant 0 : i32
    %c0_i32_0 = arith.constant 0 : i32
    %c0_i32_1 = arith.constant 0 : i32
    return %c0_i32, %c0_i32_0 : i32, i32
  }
  func.func @transform_4(%arg0: i32) -> (i32, i32) {
    %c0_i32 = arith.constant 0 : i32
    %c0_i32_0 = arith.constant 0 : i32
    %c0_i32_1 = arith.constant 0 : i32
    return %c0_i32, %c0_i32_0 : i32, i32
  }
  func.func @transform_5(%arg0: i32) -> (i32, i32) {
    %c0_i32 = arith.constant 0 : i32
    %c0_i32_0 = arith.constant 0 : i32
    %c0_i32_1 = arith.constant 0 : i32
    return %c0_i32, %c0_i32_0 : i32, i32
  }
  func.func @transform_6(%arg0: i32) -> (i32, i32) {
    %c0_i32 = arith.constant 0 : i32
    %c0_i32_0 = arith.constant 0 : i32
    %c0_i32_1 = arith.constant 0 : i32
    return %c0_i32, %c0_i32_0 : i32, i32
  }
}

</mosaic_0001>

<llo_original>
// kernel: tpu_custom_call.1
$region0: #{tpu_custom_call.1}
  #allocation0 [shape = 'u32[]', space=smem, size = 0x4, offset = 0x4, fixed_abs, tag = 'smem constant byte address 0x4 - core index']
  #allocation1 [shape = 'u32[144,128]{1,0:T(1,128)}', space=vmem, size = 0x12000, scoped, tag = 'internal scratch']
  %s0 = inlined_call_operand.hbm [shape: f32[16,16], index: 0, kind: input, shape index: {}]
  %s1 = inlined_call_operand.hbm [shape: f32[16,32], index: 1, kind: input, shape index: {}]
  %s2 = inlined_call_operand.hbm [shape: f32[32,64], index: 2, kind: input, shape index: {}]
  %s3 = inlined_call_operand.vmem [shape: f32[1,32], index: 3, kind: input, shape index: {}]
  %s4 = inlined_call_operand.hbm [shape: f32[32,32], index: 4, kind: input, shape index: {}]
  %s5 = inlined_call_operand.vmem [shape: f32[1,32], index: 5, kind: input, shape index: {}]
  %s6 = inlined_call_operand.hbm [shape: f32[16,32], index: 6, kind: output, shape index: {}]
  %s7 = sld [smem:[#allocation0]]
  $region50: #{tpu_custom_call.1} parent=0
    _
  %s9 = ssub.s32 1, %s7
  %s10 = scalar_select 0, %s9, %s7
  $region1: #{tpu_custom_call.1} parent=0
    #allocation2 [shape = 'u8[8192]{0}', space=vmem, size = 0x2000, scoped, tag = 'input window, operand 0, single buffered']
    #allocation3 [shape = 's32[1]{0}', space=sflag, size = 0x4, scoped, tag = 'scoped memory for tpu_custom_call.1']
    #allocation4 [shape = 's32[1]{0}', space=sflag, size = 0x4, scoped, tag = 'scoped memory for tpu_custom_call.1']
    #allocation5 [shape = 'u8[8192]{0}', space=vmem, size = 0x2000, scoped, tag = 'input window, operand 1, single buffered']
    #allocation6 [shape = 's32[1]{0}', space=sflag, size = 0x4, scoped, tag = 'scoped memory for tpu_custom_call.1']
    #allocation7 [shape = 'u8[16384]{0}', space=vmem, size = 0x4000, scoped, tag = 'input window, operand 2, single buffered']
    #allocation8 [shape = 'u8[16384]{0}', space=vmem, size = 0x4000, scoped, tag = 'input window, operand 4, single buffered']
    #allocation9 [shape = 's32[1]{0}', space=sflag, size = 0x4, scoped, tag = 'scoped memory for tpu_custom_call.1']
    #allocation10 [shape = 'u8[8192]{0}', space=vmem, size = 0x2000, scoped, tag = 'output window, operand 0, single buffered']
    %11 = vsyncpa [#allocation3], 0
    %12 = vsyncpa [#allocation6], 0
    %13 = vsyncpa [#allocation9], 0
    %14 = vsyncpa [#allocation4], 0
    // Predicated region
    $region2: #{tpu_custom_call.1} parent=1 // pred_check
      _
    $region3: #{tpu_custom_call.1} parent=1 // pred_check_branch
      %16 = sbr.rel (0) target = $region5
    $region4: #{tpu_custom_call.1} parent=1 // pred_region
      %s18 = ssub.s32 256, 256
      %19 = vsyncadd [#allocation3], %s18
      %s20 = sshll.u32 [#allocation2], 4
      %s21 = int_to_ptr.vmem [resolvable:$true] %s20
      %26 = dma.hbm_to_vmem [thread:$0]  %s0, 256, %s21, [#allocation3], 128, 128, 8
    $region5: #{tpu_custom_call.1} parent=1 // pred_fallthru
      _
    // Predicated region
    $region6: #{tpu_custom_call.1} parent=1 // pred_check
      _
    $region7: #{tpu_custom_call.1} parent=1 // pred_check_branch
      %28 = sbr.rel (0) target = $region9
    $region8: #{tpu_custom_call.1} parent=1 // pred_region
      %s30 = ssub.s32 256, 256
      %31 = vsyncadd [#allocation6], %s30
      %s32 = sshll.u32 [#allocation5], 4
      %s33 = int_to_ptr.vmem [resolvable:$true] %s32
      %38 = dma.hbm_to_vmem [thread:$0]  %s1, 256, %s33, [#allocation6], 128, 128, 8
    $region9: #{tpu_custom_call.1} parent=1 // pred_fallthru
      _
    // Predicated region
    $region10: #{tpu_custom_call.1} parent=1 // pred_check
      _
    $region11: #{tpu_custom_call.1} parent=1 // pred_check_branch
      %40 = sbr.rel (0) target = $region13
    $region12: #{tpu_custom_call.1} parent=1 // pred_region
      %s42 = ssub.s32 512, 512
      %43 = vsyncadd [#allocation6], %s42
      %s44 = sshll.u32 [#allocation7], 4
      %s45 = int_to_ptr.vmem [resolvable:$true] %s44
      %50 = dma.hbm_to_vmem [thread:$0]  %s2, 512, %s45, [#allocation6], 128, 128, 8
    $region13: #{tpu_custom_call.1} parent=1 // pred_fallthru
      _
    // Predicated region
    $region14: #{tpu_custom_call.1} parent=1 // pred_check
      _
    $region15: #{tpu_custom_call.1} parent=1 // pred_check_branch
      %52 = sbr.rel (0) target = $region17
    $region16: #{tpu_custom_call.1} parent=1 // pred_region
      _
    $region17: #{tpu_custom_call.1} parent=1 // pred_fallthru
      _
    // Predicated region
    $region18: #{tpu_custom_call.1} parent=1 // pred_check
      _
    $region19: #{tpu_custom_call.1} parent=1 // pred_check_branch
      %54 = sbr.rel (0) target = $region21
    $region20: #{tpu_custom_call.1} parent=1 // pred_region
      %s56 = ssub.s32 512, 512
      %57 = vsyncadd [#allocation9], %s56
      %s58 = sshll.u32 [#allocation8], 4
      %s59 = int_to_ptr.vmem [resolvable:$true] %s58
      %64 = dma.hbm_to_vmem [thread:$0]  %s4, 512, %s59, [#allocation9], 128, 128, 8
    $region21: #{tpu_custom_call.1} parent=1 // pred_fallthru
      _
    // Predicated region
    $region22: #{tpu_custom_call.1} parent=1 // pred_check
      _
    $region23: #{tpu_custom_call.1} parent=1 // pred_check_branch
      %66 = sbr.rel (0) target = $region25
    $region24: #{tpu_custom_call.1} parent=1 // pred_region
      _
    $region25: #{tpu_custom_call.1} parent=1 // pred_fallthru
      _
    // Predicated region
    $region26: #{tpu_custom_call.1} parent=1 // pred_check
      _
    $region27: #{tpu_custom_call.1} parent=1 // pred_check_branch
      %68 = sbr.rel (0) target = $region29
    $region28: #{tpu_custom_call.1} parent=1 // pred_region
      %69 = dma.done [#allocation3], 256
    $region29: #{tpu_custom_call.1} parent=1 // pred_fallthru
      _
    // Predicated region
    $region30: #{tpu_custom_call.1} parent=1 // pred_check
      _
    $region31: #{tpu_custom_call.1} parent=1 // pred_check_branch
      %71 = sbr.rel (0) target = $region33
    $region32: #{tpu_custom_call.1} parent=1 // pred_region
      %72 = dma.done [#allocation6], 256
    $region33: #{tpu_custom_call.1} parent=1 // pred_fallthru
      _
    // Predicated region
    $region34: #{tpu_custom_call.1} parent=1 // pred_check
      _
    $region35: #{tpu_custom_call.1} parent=1 // pred_check_branch
      %74 = sbr.rel (0) target = $region37
    $region36: #{tpu_custom_call.1} parent=1 // pred_region
      %75 = dma.done [#allocation6], 512
    $region37: #{tpu_custom_call.1} parent=1 // pred_fallthru
      _
    // Predicated region
    $region38: #{tpu_custom_call.1} parent=1 // pred_check
      _
    $region39: #{tpu_custom_call.1} parent=1 // pred_check_branch
      %77 = sbr.rel (0) target = $region41
    $region40: #{tpu_custom_call.1} parent=1 // pred_region
      %78 = dma.done [#allocation9], 512
    $region41: #{tpu_custom_call.1} parent=1 // pred_fallthru
      _
    %v79 = vld [vmem:[#allocation5] sm:$0xff]
    %v80 = vld [vmem:[#allocation5 + $0x8] sm:$0xff]
    %v81 = vld [vmem:[#allocation2] sm:$0xff]
    %v82 = vld [vmem:[#allocation2 + $0x8] sm:$0xff]
    %v83 = vld [vmem:[#allocation7] sm:$0xff]
    %v84 = vld [vmem:[#allocation7 + $0x8] sm:$0xff]
    %v85 = vld [vmem:[#allocation7 + $0x10] sm:$0xff]
    %v86 = vld [vmem:[#allocation7 + $0x18] sm:$0xff]
    %v87 = vld [vmem:[#allocation8] sm:$0xff]
    %v88 = vld [vmem:[#allocation8 + $0x8] sm:$0xff]
    %v89 = vld [vmem:[#allocation8 + $0x10] sm:$0xff]
    %v90 = vld [vmem:[#allocation8 + $0x18] sm:$0xff]
    %v91 = vld [vmem:[%s3] sm:$0x1]
    %v93 = vlaneseq
    %v94 = vshrl.u32 %v93, 7
    %v95 = vsub.s32 0, %v94
    %v96 = vrot.slane %v91, %v95
    %v98 = vld [vmem:[%s5] sm:$0x1]
    %v100 = vlaneseq
    %v101 = vshrl.u32 %v100, 7
    %v102 = vsub.s32 0, %v101
    %v103 = vrot.slane %v98, %v102
    %vm105 = vcmask 261120
    %v107 = vsel %vm105, %v79, 0
    %v110 = vsel %vm105, %v80, 0
    %112 = vmatprep.subr.mxu0 0.0
    %113 = vmatpush1.msra.mxu0 %v83
    %114 = vmatprep.subr.mxu0 0.0
    %115 = vmatpush1.msra.mxu0 %v84
    %116 = vmatprep.subr.mxu0 0.0
    %117 = vmatpush1.msra.mxu0 %v85
    %118 = vmatprep.subr.mxu0 0.0
    %119 = vmatpush1.msra.mxu0 %v86
    %120 = vmatprep.subr.mxu0 0.0
    %121 = vmatpush1.msra.mxu0 0.0
    %122 = vmatprep.subr.mxu0 0.0
    %123 = vmatpush1.msra.mxu0 0.0
    %124 = vmatprep.subr.mxu0 0.0
    %125 = vmatpush1.msra.mxu0 0.0
    %126 = vmatprep.subr.mxu0 0.0
    %127 = vmatpush1.msra.mxu0 0.0
    %128 = vmatprep.subr.mxu0 0.0
    %129 = vmatpush1.msra.mxu0 0.0
    %130 = vmatprep.subr.mxu0 0.0
    %131 = vmatpush1.msra.mxu0 0.0
    %132 = vmatprep.subr.mxu0 0.0
    %133 = vmatpush1.msra.mxu0 0.0
    %134 = vmatprep.subr.mxu0 0.0
    %135 = vmatpush1.msra.mxu0 0.0
    %136 = vmatprep.subr.mxu0 0.0
    %137 = vmatpush1.msra.mxu0 0.0
    %138 = vmatprep.subr.mxu0 0.0
    %139 = vmatpush1.msra.mxu0 0.0
    %140 = vmatprep.subr.mxu0 0.0
    %141 = vmatpush1.msra.mxu0 0.0
    %142 = vmatprep.subr.mxu0 0.0
    %143 = vmatpush1.msra.mxu0 0.0
    %144 = vmatprep.subr.mxu0 0.0
    %145 = vmatpush1.msra.mxu0 0.0
    %146 = vmatprep.subr.mxu0 0.0
    %147 = vmatpush1.msra.mxu0 0.0
    %148 = vmatprep.subr.mxu0 0.0
    %149 = vmatpush1.msra.mxu0 0.0
    %150 = vmatprep.subr.mxu0 0.0
    %151 = vmatpush1.msra.mxu0 0.0
    %152 = vmatprep.subr.mxu0 0.0
    %153 = vmatpush1.msra.mxu0 0.0
    %154 = vmatprep.subr.mxu0 0.0
    %155 = vmatpush1.msra.mxu0 0.0
    %156 = vmatprep.subr.mxu0 0.0
    %157 = vmatpush1.msra.mxu0 0.0
    %158 = vmatprep.subr.mxu0 0.0
    %159 = vmatpush1.msra.mxu0 0.0
    %160 = vmatprep.subr.mxu0 0.0
    %161 = vmatpush1.msra.mxu0 0.0
    %162 = vmatprep.subr.mxu0 0.0
    %163 = vmatpush1.msra.mxu0 0.0
    %164 = vmatprep.subr.mxu0 0.0
    %165 = vmatpush1.msra.mxu0 0.0
    %166 = vmatprep.subr.mxu0 0.0
    %167 = vmatpush1.msra.mxu0 0.0
    %168 = vmatprep.subr.mxu0 0.0
    %169 = vmatpush1.msra.mxu0 0.0
    %170 = vmatprep.subr.mxu0 0.0
    %171 = vmatpush1.msra.mxu0 0.0
    %172 = vmatprep.subr.mxu0 0.0
    %173 = vmatpush1.msra.mxu0 0.0
    %174 = vmatprep.subr.mxu0 0.0
    %175 = vmatpush1.msra.mxu0 0.0
    %176 = vmatprep.mubr.f32.mxu0 0.0
    %177 = vmatmul.mubr.f32.gmra.mrb[0].mxu0 %v107
    %v178 = vpop.f32.mrb[0].mxu0
    %v179 = vadd.f32 0.0, %v178
    %v180 = vpop.f32.mrb[0].mxu0
    %181 = vmatprep.mubr.f32.mxu0 0.0
    %182 = vmatmul.mubr.f32.gmra.mrb[0].mxu0 %v110
    %v183 = vpop.f32.mrb[0].mxu0
    %v184 = vadd.f32 0.0, %v183
    %v185 = vpop.f32.mrb[0].mxu0
    %186 = vdwg.mxu0
    %189 = vrot.lane.b32.xlu0 %v179, 96
    %v190 = vpop.permute.xlu0 %189
    %191 = vrot.lane.b32.xlu0 %v184, 96
    %v192 = vpop.permute.xlu0 %191
    %vm195 = vcmask 130048
    %v197 = vsel %vm195, %v81, 0
    %v200 = vsel %vm195, %v82, 0
    %202 = vmatprep.subr.mxu0 0.0
    %203 = vmatpush1.msra.mxu0 %v190
    %204 = vmatprep.subr.mxu0 0.0
    %205 = vmatpush1.msra.mxu0 %v192
    %206 = vmatprep.subr.mxu0 0.0
    %207 = vmatpush1.msra.mxu0 0.0
    %208 = vmatprep.subr.mxu0 0.0
    %209 = vmatpush1.msra.mxu0 0.0
    %210 = vmatprep.subr.mxu0 0.0
    %211 = vmatpush1.msra.mxu0 0.0
    %212 = vmatprep.subr.mxu0 0.0
    %213 = vmatpush1.msra.mxu0 0.0
    %214 = vmatprep.subr.mxu0 0.0
    %215 = vmatpush1.msra.mxu0 0.0
    %216 = vmatprep.subr.mxu0 0.0
    %217 = vmatpush1.msra.mxu0 0.0
    %218 = vmatprep.subr.mxu0 0.0
    %219 = vmatpush1.msra.mxu0 0.0
    %220 = vmatprep.subr.mxu0 0.0
    %221 = vmatpush1.msra.mxu0 0.0
    %222 = vmatprep.subr.mxu0 0.0
    %223 = vmatpush1.msra.mxu0 0.0
    %224 = vmatprep.subr.mxu0 0.0
    %225 = vmatpush1.msra.mxu0 0.0
    %226 = vmatprep.subr.mxu0 0.0
    %227 = vmatpush1.msra.mxu0 0.0
    %228 = vmatprep.subr.mxu0 0.0
    %229 = vmatpush1.msra.mxu0 0.0
    %230 = vmatprep.subr.mxu0 0.0
    %231 = vmatpush1.msra.mxu0 0.0
    %232 = vmatprep.subr.mxu0 0.0
    %233 = vmatpush1.msra.mxu0 0.0
    %234 = vmatprep.subr.mxu0 0.0
    %235 = vmatpush1.msra.mxu0 0.0
    %236 = vmatprep.subr.mxu0 0.0
    %237 = vmatpush1.msra.mxu0 0.0
    %238 = vmatprep.subr.mxu0 0.0
    %239 = vmatpush1.msra.mxu0 0.0
    %240 = vmatprep.subr.mxu0 0.0
    %241 = vmatpush1.msra.mxu0 0.0
    %242 = vmatprep.subr.mxu0 0.0
    %243 = vmatpush1.msra.mxu0 0.0
    %244 = vmatprep.subr.mxu0 0.0
    %245 = vmatpush1.msra.mxu0 0.0
    %246 = vmatprep.subr.mxu0 0.0
    %247 = vmatpush1.msra.mxu0 0.0
    %248 = vmatprep.subr.mxu0 0.0
    %249 = vmatpush1.msra.mxu0 0.0
    %250 = vmatprep.subr.mxu0 0.0
    %251 = vmatpush1.msra.mxu0 0.0
    %252 = vmatprep.subr.mxu0 0.0
    %253 = vmatpush1.msra.mxu0 0.0
    %254 = vmatprep.subr.mxu0 0.0
    %255 = vmatpush1.msra.mxu0 0.0
    %256 = vmatprep.subr.mxu0 0.0
    %257 = vmatpush1.msra.mxu0 0.0
    %258 = vmatprep.subr.mxu0 0.0
    %259 = vmatpush1.msra.mxu0 0.0
    %260 = vmatprep.subr.mxu0 0.0
    %261 = vmatpush1.msra.mxu0 0.0
    %262 = vmatprep.subr.mxu0 0.0
    %263 = vmatpush1.msra.mxu0 0.0
    %264 = vmatprep.subr.mxu0 0.0
    %265 = vmatpush1.msra.mxu0 0.0
    %266 = vmatprep.mubr.f32.mxu0 0.0
    %267 = vmatmul.mubr.f32.gmra.mrb[0].mxu0 %v197
    %v268 = vpop.f32.mrb[0].mxu0
    %v269 = vadd.f32 0.0, %v268
    %v270 = vpop.f32.mrb[0].mxu0
    %271 = vmatprep.mubr.f32.mxu0 0.0
    %272 = vmatmul.mubr.f32.gmra.mrb[0].mxu0 %v200
    %v273 = vpop.f32.mrb[0].mxu0
    %v274 = vadd.f32 0.0, %v273
    %v275 = vpop.f32.mrb[0].mxu0
    %276 = vdwg.mxu0
    %v277 = vadd.f32 %v179, %v269
    %v278 = vadd.f32 %v184, %v274
    %v279 = vadd.f32 %v277, %v96
    %v280 = vadd.f32 %v278, %v96
    %v281 = vmax.f32 %v279, 0.0
    %v282 = vmax.f32 %v280, 0.0
    %v284 = vsel %vm105, %v281, 0
    %v287 = vsel %vm105, %v282, 0
    %289 = vmatprep.subr.mxu0 0.0
    %290 = vmatpush1.msra.mxu0 %v87
    %291 = vmatprep.subr.mxu0 0.0
    %292 = vmatpush1.msra.mxu0 %v88
    %293 = vmatprep.subr.mxu0 0.0
    %294 = vmatpush1.msra.mxu0 %v89
    %295 = vmatprep.subr.mxu0 0.0
    %296 = vmatpush1.msra.mxu0 %v90
    %297 = vmatprep.subr.mxu0 0.0
    %298 = vmatpush1.msra.mxu0 0.0
    %299 = vmatprep.subr.mxu0 0.0
    %300 = vmatpush1.msra.mxu0 0.0
    %301 = vmatprep.subr.mxu0 0.0
    %302 = vmatpush1.msra.mxu0 0.0
    %303 = vmatprep.subr.mxu0 0.0
    %304 = vmatpush1.msra.mxu0 0.0
    %305 = vmatprep.subr.mxu0 0.0
    %306 = vmatpush1.msra.mxu0 0.0
    %307 = vmatprep.subr.mxu0 0.0
    %308 = vmatpush1.msra.mxu0 0.0
    %309 = vmatprep.subr.mxu0 0.0
    %310 = vmatpush1.msra.mxu0 0.0
    %311 = vmatprep.subr.mxu0 0.0
    %312 = vmatpush1.msra.mxu0 0.0
    %313 = vmatprep.subr.mxu0 0.0
    %314 = vmatpush1.msra.mxu0 0.0
    %315 = vmatprep.subr.mxu0 0.0
    %316 = vmatpush1.msra.mxu0 0.0
    %317 = vmatprep.subr.mxu0 0.0
    %318 = vmatpush1.msra.mxu0 0.0
    %319 = vmatprep.subr.mxu0 0.0
    %320 = vmatpush1.msra.mxu0 0.0
    %321 = vmatprep.subr.mxu0 0.0
    %322 = vmatpush1.msra.mxu0 0.0
    %323 = vmatprep.subr.mxu0 0.0
    %324 = vmatpush1.msra.mxu0 0.0
    %325 = vmatprep.subr.mxu0 0.0
    %326 = vmatpush1.msra.mxu0 0.0
    %327 = vmatprep.subr.mxu0 0.0
    %328 = vmatpush1.msra.mxu0 0.0
    %329 = vmatprep.subr.mxu0 0.0
    %330 = vmatpush1.msra.mxu0 0.0
    %331 = vmatprep.subr.mxu0 0.0
    %332 = vmatpush1.msra.mxu0 0.0
    %333 = vmatprep.subr.mxu0 0.0
    %334 = vmatpush1.msra.mxu0 0.0
    %335 = vmatprep.subr.mxu0 0.0
    %336 = vmatpush1.msra.mxu0 0.0
    %337 = vmatprep.subr.mxu0 0.0
    %338 = vmatpush1.msra.mxu0 0.0
    %339 = vmatprep.subr.mxu0 0.0
    %340 = vmatpush1.msra.mxu0 0.0
    %341 = vmatprep.subr.mxu0 0.0
    %342 = vmatpush1.msra.mxu0 0.0
    %343 = vmatprep.subr.mxu0 0.0
    %344 = vmatpush1.msra.mxu0 0.0
    %345 = vmatprep.subr.mxu0 0.0
    %346 = vmatpush1.msra.mxu0 0.0
    %347 = vmatprep.subr.mxu0 0.0
    %348 = vmatpush1.msra.mxu0 0.0
    %349 = vmatprep.subr.mxu0 0.0
    %350 = vmatpush1.msra.mxu0 0.0
    %351 = vmatprep.subr.mxu0 0.0
    %352 = vmatpush1.msra.mxu0 0.0
    %353 = vmatprep.mubr.f32.mxu0 0.0
    %354 = vmatmul.mubr.f32.gmra.mrb[0].mxu0 %v284
    %v355 = vpop.f32.mrb[0].mxu0
    %v356 = vadd.f32 %v103, %v355
    %v357 = vpop.f32.mrb[0].mxu0
    %358 = vmatprep.mubr.f32.mxu0 0.0
    %359 = vmatmul.mubr.f32.gmra.mrb[0].mxu0 %v287
    %v360 = vpop.f32.mrb[0].mxu0
    %v361 = vadd.f32 %v103, %v360
    %v362 = vpop.f32.mrb[0].mxu0
    %363 = vdwg.mxu0
    %v365 = vsel %vm105, %v356, 0
    %v368 = vsel %vm105, %v361, 0
    %370 = vmatprep.subr.mxu0 0.0
    %371 = vmatpush1.msra.mxu0 %v83
    %372 = vmatprep.subr.mxu0 0.0
    %373 = vmatpush1.msra.mxu0 %v84
    %374 = vmatprep.subr.mxu0 0.0
    %375 = vmatpush1.msra.mxu0 %v85
    %376 = vmatprep.subr.mxu0 0.0
    %377 = vmatpush1.msra.mxu0 %v86
    %378 = vmatprep.subr.mxu0 0.0
    %379 = vmatpush1.msra.mxu0 0.0
    %380 = vmatprep.subr.mxu0 0.0
    %381 = vmatpush1.msra.mxu0 0.0
    %382 = vmatprep.subr.mxu0 0.0
    %383 = vmatpush1.msra.mxu0 0.0
    %384 = vmatprep.subr.mxu0 0.0
    %385 = vmatpush1.msra.mxu0 0.0
    %386 = vmatprep.subr.mxu0 0.0
    %387 = vmatpush1.msra.mxu0 0.0
    %388 = vmatprep.subr.mxu0 0.0
    %389 = vmatpush1.msra.mxu0 0.0
    %390 = vmatprep.subr.mxu0 0.0
    %391 = vmatpush1.msra.mxu0 0.0
    %392 = vmatprep.subr.mxu0 0.0
    %393 = vmatpush1.msra.mxu0 0.0
    %394 = vmatprep.subr.mxu0 0.0
    %395 = vmatpush1.msra.mxu0 0.0
    %396 = vmatprep.subr.mxu0 0.0
    %397 = vmatpush1.msra.mxu0 0.0
    %398 = vmatprep.subr.mxu0 0.0
    %399 = vmatpush1.msra.mxu0 0.0
    %400 = vmatprep.subr.mxu0 0.0
    %401 = vmatpush1.msra.mxu0 0.0
    %402 = vmatprep.subr.mxu0 0.0
    %403 = vmatpush1.msra.mxu0 0.0
    %404 = vmatprep.subr.mxu0 0.0
    %405 = vmatpush1.msra.mxu0 0.0
    %406 = vmatprep.subr.mxu0 0.0
    %407 = vmatpush1.msra.mxu0 0.0
    %408 = vmatprep.subr.mxu0 0.0
    %409 = vmatpush1.msra.mxu0 0.0
    %410 = vmatprep.subr.mxu0 0.0
    %411 = vmatpush1.msra.mxu0 0.0
    %412 = vmatprep.subr.mxu0 0.0
    %413 = vmatpush1.msra.mxu0 0.0
    %414 = vmatprep.subr.mxu0 0.0
    %415 = vmatpush1.msra.mxu0 0.0
    %416 = vmatprep.subr.mxu0 0.0
    %417 = vmatpush1.msra.mxu0 0.0
    %418 = vmatprep.subr.mxu0 0.0
    %419 = vmatpush1.msra.mxu0 0.0
    %420 = vmatprep.subr.mxu0 0.0
    %421 = vmatpush1.msra.mxu0 0.0
    %422 = vmatprep.subr.mxu0 0.0
    %423 = vmatpush1.msra.mxu0 0.0
    %424 = vmatprep.subr.mxu0 0.0
    %425 = vmatpush1.msra.mxu0 0.0
    %426 = vmatprep.subr.mxu0 0.0
    %427 = vmatpush1.msra.mxu0 0.0
    %428 = vmatprep.subr.mxu0 0.0
    %429 = vmatpush1.msra.mxu0 0.0
    %430 = vmatprep.subr.mxu0 0.0
    %431 = vmatpush1.msra.mxu0 0.0
    %432 = vmatprep.subr.mxu0 0.0
    %433 = vmatpush1.msra.mxu0 0.0
    %434 = vmatprep.mubr.f32.mxu0 0.0
    %435 = vmatmul.mubr.f32.gmra.mrb[0].mxu0 %v365
    %v436 = vpop.f32.mrb[0].mxu0
    %v437 = vadd.f32 0.0, %v436
    %v438 = vpop.f32.mrb[0].mxu0
    %439 = vmatprep.mubr.f32.mxu0 0.0
    %440 = vmatmul.mubr.f32.gmra.mrb[0].mxu0 %v368
    %v441 = vpop.f32.mrb[0].mxu0
    %v442 = vadd.f32 0.0, %v441
    %v443 = vpop.f32.mrb[0].mxu0
    %444 = vdwg.mxu0
    %447 = vrot.lane.b32.xlu0 %v437, 96
    %v448 = vpop.permute.xlu0 %447
    %449 = vrot.lane.b32.xlu0 %v442, 96
    %v450 = vpop.permute.xlu0 %449
    %453 = vmatprep.subr.mxu0 0.0
    %454 = vmatpush1.msra.mxu0 %v448
    %455 = vmatprep.subr.mxu0 0.0
    %456 = vmatpush1.msra.mxu0 %v450
    %457 = vmatprep.subr.mxu0 0.0
    %458 = vmatpush1.msra.mxu0 0.0
    %459 = vmatprep.subr.mxu0 0.0
    %460 = vmatpush1.msra.mxu0 0.0
    %461 = vmatprep.subr.mxu0 0.0
    %462 = vmatpush1.msra.mxu0 0.0
    %463 = vmatprep.subr.mxu0 0.0
    %464 = vmatpush1.msra.mxu0 0.0
    %465 = vmatprep.subr.mxu0 0.0
    %466 = vmatpush1.msra.mxu0 0.0
    %467 = vmatprep.subr.mxu0 0.0
    %468 = vmatpush1.msra.mxu0 0.0
    %469 = vmatprep.subr.mxu0 0.0
    %470 = vmatpush1.msra.mxu0 0.0
    %471 = vmatprep.subr.mxu0 0.0
    %472 = vmatpush1.msra.mxu0 0.0
    %473 = vmatprep.subr.mxu0 0.0
    %474 = vmatpush1.msra.mxu0 0.0
    %475 = vmatprep.subr.mxu0 0.0
    %476 = vmatpush1.msra.mxu0 0.0
    %477 = vmatprep.subr.mxu0 0.0
    %478 = vmatpush1.msra.mxu0 0.0
    %479 = vmatprep.subr.mxu0 0.0
    %480 = vmatpush1.msra.mxu0 0.0
    %481 = vmatprep.subr.mxu0 0.0
    %482 = vmatpush1.msra.mxu0 0.0
    %483 = vmatprep.subr.mxu0 0.0
    %484 = vmatpush1.msra.mxu0 0.0
    %485 = vmatprep.subr.mxu0 0.0
    %486 = vmatpush1.msra.mxu0 0.0
    %487 = vmatprep.subr.mxu0 0.0
    %488 = vmatpush1.msra.mxu0 0.0
    %489 = vmatprep.subr.mxu0 0.0
    %490 = vmatpush1.msra.mxu0 0.0
    %491 = vmatprep.subr.mxu0 0.0
    %492 = vmatpush1.msra.mxu0 0.0
    %493 = vmatprep.subr.mxu0 0.0
    %494 = vmatpush1.msra.mxu0 0.0
    %495 = vmatprep.subr.mxu0 0.0
    %496 = vmatpush1.msra.mxu0 0.0
    %497 = vmatprep.subr.mxu0 0.0
    %498 = vmatpush1.msra.mxu0 0.0
    %499 = vmatprep.subr.mxu0 0.0
    %500 = vmatpush1.msra.mxu0 0.0
    %501 = vmatprep.subr.mxu0 0.0
    %502 = vmatpush1.msra.mxu0 0.0
    %503 = vmatprep.subr.mxu0 0.0
    %504 = vmatpush1.msra.mxu0 0.0
    %505 = vmatprep.subr.mxu0 0.0
    %506 = vmatpush1.msra.mxu0 0.0
    %507 = vmatprep.subr.mxu0 0.0
    %508 = vmatpush1.msra.mxu0 0.0
    %509 = vmatprep.subr.mxu0 0.0
    %510 = vmatpush1.msra.mxu0 0.0
    %511 = vmatprep.subr.mxu0 0.0
    %512 = vmatpush1.msra.mxu0 0.0
    %513 = vmatprep.subr.mxu0 0.0
    %514 = vmatpush1.msra.mxu0 0.0
    %515 = vmatprep.subr.mxu0 0.0
    %516 = vmatpush1.msra.mxu0 0.0
    %517 = vmatprep.mubr.f32.mxu0 0.0
    %518 = vmatmul.mubr.f32.gmra.mrb[0].mxu0 %v197
    %v519 = vpop.f32.mrb[0].mxu0
    %v520 = vadd.f32 0.0, %v519
    %v521 = vpop.f32.mrb[0].mxu0
    %522 = vmatprep.mubr.f32.mxu0 0.0
    %523 = vmatmul.mubr.f32.gmra.mrb[0].mxu0 %v200
    %v524 = vpop.f32.mrb[0].mxu0
    %v525 = vadd.f32 0.0, %v524
    %v526 = vpop.f32.mrb[0].mxu0
    %527 = vdwg.mxu0
    %v528 = vadd.f32 %v437, %v520
    %v529 = vadd.f32 %v442, %v525
    %v530 = vadd.f32 %v528, %v96
    %v531 = vadd.f32 %v529, %v96
    %v532 = vmax.f32 %v530, 0.0
    %v533 = vmax.f32 %v531, 0.0
    %v535 = vsel %vm105, %v532, 0
    %v538 = vsel %vm105, %v533, 0
    %540 = vmatprep.subr.mxu0 0.0
    %541 = vmatpush1.msra.mxu0 %v87
    %542 = vmatprep.subr.mxu0 0.0
    %543 = vmatpush1.msra.mxu0 %v88
    %544 = vmatprep.subr.mxu0 0.0
    %545 = vmatpush1.msra.mxu0 %v89
    %546 = vmatprep.subr.mxu0 0.0
    %547 = vmatpush1.msra.mxu0 %v90
    %548 = vmatprep.subr.mxu0 0.0
    %549 = vmatpush1.msra.mxu0 0.0
    %550 = vmatprep.subr.mxu0 0.0
    %551 = vmatpush1.msra.mxu0 0.0
    %552 = vmatprep.subr.mxu0 0.0
    %553 = vmatpush1.msra.mxu0 0.0
    %554 = vmatprep.subr.mxu0 0.0
    %555 = vmatpush1.msra.mxu0 0.0
    %556 = vmatprep.subr.mxu0 0.0
    %557 = vmatpush1.msra.mxu0 0.0
    %558 = vmatprep.subr.mxu0 0.0
    %559 = vmatpush1.msra.mxu0 0.0
    %560 = vmatprep.subr.mxu0 0.0
    %561 = vmatpush1.msra.mxu0 0.0
    %562 = vmatprep.subr.mxu0 0.0
    %563 = vmatpush1.msra.mxu0 0.0
    %564 = vmatprep.subr.mxu0 0.0
    %565 = vmatpush1.msra.mxu0 0.0
    %566 = vmatprep.subr.mxu0 0.0
    %567 = vmatpush1.msra.mxu0 0.0
    %568 = vmatprep.subr.mxu0 0.0
    %569 = vmatpush1.msra.mxu0 0.0
    %570 = vmatprep.subr.mxu0 0.0
    %571 = vmatpush1.msra.mxu0 0.0
    %572 = vmatprep.subr.mxu0 0.0
    %573 = vmatpush1.msra.mxu0 0.0
    %574 = vmatprep.subr.mxu0 0.0
    %575 = vmatpush1.msra.mxu0 0.0
    %576 = vmatprep.subr.mxu0 0.0
    %577 = vmatpush1.msra.mxu0 0.0
    %578 = vmatprep.subr.mxu0 0.0
    %579 = vmatpush1.msra.mxu0 0.0
    %580 = vmatprep.subr.mxu0 0.0
    %581 = vmatpush1.msra.mxu0 0.0
    %582 = vmatprep.subr.mxu0 0.0
    %583 = vmatpush1.msra.mxu0 0.0
    %584 = vmatprep.subr.mxu0 0.0
    %585 = vmatpush1.msra.mxu0 0.0
    %586 = vmatprep.subr.mxu0 0.0
    %587 = vmatpush1.msra.mxu0 0.0
    %588 = vmatprep.subr.mxu0 0.0
    %589 = vmatpush1.msra.mxu0 0.0
    %590 = vmatprep.subr.mxu0 0.0
    %591 = vmatpush1.msra.mxu0 0.0
    %592 = vmatprep.subr.mxu0 0.0
    %593 = vmatpush1.msra.mxu0 0.0
    %594 = vmatprep.subr.mxu0 0.0
    %595 = vmatpush1.msra.mxu0 0.0
    %596 = vmatprep.subr.mxu0 0.0
    %597 = vmatpush1.msra.mxu0 0.0
    %598 = vmatprep.subr.mxu0 0.0
    %599 = vmatpush1.msra.mxu0 0.0
    %600 = vmatprep.subr.mxu0 0.0
    %601 = vmatpush1.msra.mxu0 0.0
    %602 = vmatprep.subr.mxu0 0.0
    %603 = vmatpush1.msra.mxu0 0.0
    %604 = vmatprep.mubr.f32.mxu0 0.0
    %605 = vmatmul.mubr.f32.gmra.mrb[0].mxu0 %v535
    %v606 = vpop.f32.mrb[0].mxu0
    %v607 = vadd.f32 %v103, %v606
    %v608 = vpop.f32.mrb[0].mxu0
    %609 = vmatprep.mubr.f32.mxu0 0.0
    %610 = vmatmul.mubr.f32.gmra.mrb[0].mxu0 %v538
    %v611 = vpop.f32.mrb[0].mxu0
    %v612 = vadd.f32 %v103, %v611
    %v613 = vpop.f32.mrb[0].mxu0
    %614 = vdwg.mxu0
    %v616 = vsel %vm105, %v607, 0
    %v619 = vsel %vm105, %v612, 0
    %621 = vmatprep.subr.mxu0 0.0
    %622 = vmatpush1.msra.mxu0 %v83
    %623 = vmatprep.subr.mxu0 0.0
    %624 = vmatpush1.msra.mxu0 %v84
    %625 = vmatprep.subr.mxu0 0.0
    %626 = vmatpush1.msra.mxu0 %v85
    %627 = vmatprep.subr.mxu0 0.0
    %628 = vmatpush1.msra.mxu0 %v86
    %629 = vmatprep.subr.mxu0 0.0
    %630 = vmatpush1.msra.mxu0 0.0
    %631 = vmatprep.subr.mxu0 0.0
    %632 = vmatpush1.msra.mxu0 0.0
    %633 = vmatprep.subr.mxu0 0.0
    %634 = vmatpush1.msra.mxu0 0.0
    %635 = vmatprep.subr.mxu0 0.0
    %636 = vmatpush1.msra.mxu0 0.0
    %637 = vmatprep.subr.mxu0 0.0
    %638 = vmatpush1.msra.mxu0 0.0
    %639 = vmatprep.subr.mxu0 0.0
    %640 = vmatpush1.msra.mxu0 0.0
    %641 = vmatprep.subr.mxu0 0.0
    %642 = vmatpush1.msra.mxu0 0.0
    %643 = vmatprep.subr.mxu0 0.0
    %644 = vmatpush1.msra.mxu0 0.0
    %645 = vmatprep.subr.mxu0 0.0
    %646 = vmatpush1.msra.mxu0 0.0
    %647 = vmatprep.subr.mxu0 0.0
    %648 = vmatpush1.msra.mxu0 0.0
    %649 = vmatprep.subr.mxu0 0.0
    %650 = vmatpush1.msra.mxu0 0.0
    %651 = vmatprep.subr.mxu0 0.0
    %652 = vmatpush1.msra.mxu0 0.0
    %653 = vmatprep.subr.mxu0 0.0
    %654 = vmatpush1.msra.mxu0 0.0
    %655 = vmatprep.subr.mxu0 0.0
    %656 = vmatpush1.msra.mxu0 0.0
    %657 = vmatprep.subr.mxu0 0.0
    %658 = vmatpush1.msra.mxu0 0.0
    %659 = vmatprep.subr.mxu0 0.0
    %660 = vmatpush1.msra.mxu0 0.0
    %661 = vmatprep.subr.mxu0 0.0
    %662 = vmatpush1.msra.mxu0 0.0
    %663 = vmatprep.subr.mxu0 0.0
    %664 = vmatpush1.msra.mxu0 0.0
    %665 = vmatprep.subr.mxu0 0.0
    %666 = vmatpush1.msra.mxu0 0.0
    %667 = vmatprep.subr.mxu0 0.0
    %668 = vmatpush1.msra.mxu0 0.0
    %669 = vmatprep.subr.mxu0 0.0
    %670 = vmatpush1.msra.mxu0 0.0
    %671 = vmatprep.subr.mxu0 0.0
    %672 = vmatpush1.msra.mxu0 0.0
    %673 = vmatprep.subr.mxu0 0.0
    %674 = vmatpush1.msra.mxu0 0.0
    %675 = vmatprep.subr.mxu0 0.0
    %676 = vmatpush1.msra.mxu0 0.0
    %677 = vmatprep.subr.mxu0 0.0
    %678 = vmatpush1.msra.mxu0 0.0
    %679 = vmatprep.subr.mxu0 0.0
    %680 = vmatpush1.msra.mxu0 0.0
    %681 = vmatprep.subr.mxu0 0.0
    %682 = vmatpush1.msra.mxu0 0.0
    %683 = vmatprep.subr.mxu0 0.0
    %684 = vmatpush1.msra.mxu0 0.0
    %685 = vmatprep.mubr.f32.mxu0 0.0
    %686 = vmatmul.mubr.f32.gmra.mrb[0].mxu0 %v616
    %v687 = vpop.f32.mrb[0].mxu0
    %v688 = vadd.f32 0.0, %v687
    %v689 = vpop.f32.mrb[0].mxu0
    %690 = vmatprep.mubr.f32.mxu0 0.0
    %691 = vmatmul.mubr.f32.gmra.mrb[0].mxu0 %v619
    %v692 = vpop.f32.mrb[0].mxu0
    %v693 = vadd.f32 0.0, %v692
    %v694 = vpop.f32.mrb[0].mxu0
    %695 = vdwg.mxu0
    %698 = vrot.lane.b32.xlu0 %v688, 96
    %v699 = vpop.permute.xlu0 %698
    %700 = vrot.lane.b32.xlu0 %v693, 96
    %v701 = vpop.permute.xlu0 %700
    %704 = vmatprep.subr.mxu0 0.0
    %705 = vmatpush1.msra.mxu0 %v699
    %706 = vmatprep.subr.mxu0 0.0
    %707 = vmatpush1.msra.mxu0 %v701
    %708 = vmatprep.subr.mxu0 0.0
    %709 = vmatpush1.msra.mxu0 0.0
    %710 = vmatprep.subr.mxu0 0.0
    %711 = vmatpush1.msra.mxu0 0.0
    %712 = vmatprep.subr.mxu0 0.0
    %713 = vmatpush1.msra.mxu0 0.0
    %714 = vmatprep.subr.mxu0 0.0
    %715 = vmatpush1.msra.mxu0 0.0
    %716 = vmatprep.subr.mxu0 0.0
    %717 = vmatpush1.msra.mxu0 0.0
    %718 = vmatprep.subr.mxu0 0.0
    %719 = vmatpush1.msra.mxu0 0.0
    %720 = vmatprep.subr.mxu0 0.0
    %721 = vmatpush1.msra.mxu0 0.0
    %722 = vmatprep.subr.mxu0 0.0
    %723 = vmatpush1.msra.mxu0 0.0
    %724 = vmatprep.subr.mxu0 0.0
    %725 = vmatpush1.msra.mxu0 0.0
    %726 = vmatprep.subr.mxu0 0.0
    %727 = vmatpush1.msra.mxu0 0.0
    %728 = vmatprep.subr.mxu0 0.0
    %729 = vmatpush1.msra.mxu0 0.0
    %730 = vmatprep.subr.mxu0 0.0
    %731 = vmatpush1.msra.mxu0 0.0
    %732 = vmatprep.subr.mxu0 0.0
    %733 = vmatpush1.msra.mxu0 0.0
    %734 = vmatprep.subr.mxu0 0.0
    %735 = vmatpush1.msra.mxu0 0.0
    %736 = vmatprep.subr.mxu0 0.0
    %737 = vmatpush1.msra.mxu0 0.0
    %738 = vmatprep.subr.mxu0 0.0
    %739 = vmatpush1.msra.mxu0 0.0
    %740 = vmatprep.subr.mxu0 0.0
    %741 = vmatpush1.msra.mxu0 0.0
    %742 = vmatprep.subr.mxu0 0.0
    %743 = vmatpush1.msra.mxu0 0.0
    %744 = vmatprep.subr.mxu0 0.0
    %745 = vmatpush1.msra.mxu0 0.0
    %746 = vmatprep.subr.mxu0 0.0
    %747 = vmatpush1.msra.mxu0 0.0
    %748 = vmatprep.subr.mxu0 0.0
    %749 = vmatpush1.msra.mxu0 0.0
    %750 = vmatprep.subr.mxu0 0.0
    %751 = vmatpush1.msra.mxu0 0.0
    %752 = vmatprep.subr.mxu0 0.0
    %753 = vmatpush1.msra.mxu0 0.0
    %754 = vmatprep.subr.mxu0 0.0
    %755 = vmatpush1.msra.mxu0 0.0
    %756 = vmatprep.subr.mxu0 0.0
    %757 = vmatpush1.msra.mxu0 0.0
    %758 = vmatprep.subr.mxu0 0.0
    %759 = vmatpush1.msra.mxu0 0.0
    %760 = vmatprep.subr.mxu0 0.0
    %761 = vmatpush1.msra.mxu0 0.0
    %762 = vmatprep.subr.mxu0 0.0
    %763 = vmatpush1.msra.mxu0 0.0
    %764 = vmatprep.subr.mxu0 0.0
    %765 = vmatpush1.msra.mxu0 0.0
    %766 = vmatprep.subr.mxu0 0.0
    %767 = vmatpush1.msra.mxu0 0.0
    %768 = vmatprep.mubr.f32.mxu0 0.0
    %769 = vmatmul.mubr.f32.gmra.mrb[0].mxu0 %v197
    %v770 = vpop.f32.mrb[0].mxu0
    %v771 = vadd.f32 0.0, %v770
    %v772 = vpop.f32.mrb[0].mxu0
    %773 = vmatprep.mubr.f32.mxu0 0.0
    %774 = vmatmul.mubr.f32.gmra.mrb[0].mxu0 %v200
    %v775 = vpop.f32.mrb[0].mxu0
    %v776 = vadd.f32 0.0, %v775
    %v777 = vpop.f32.mrb[0].mxu0
    %778 = vdwg.mxu0
    %v779 = vadd.f32 %v688, %v771
    %v780 = vadd.f32 %v693, %v776
    %v781 = vadd.f32 %v779, %v96
    %v782 = vadd.f32 %v780, %v96
    %v783 = vmax.f32 %v781, 0.0
    %v784 = vmax.f32 %v782, 0.0
    %v786 = vsel %vm105, %v783, 0
    %v789 = vsel %vm105, %v784, 0
    %791 = vmatprep.subr.mxu0 0.0
    %792 = vmatpush1.msra.mxu0 %v87
    %793 = vmatprep.subr.mxu0 0.0
    %794 = vmatpush1.msra.mxu0 %v88
    %795 = vmatprep.subr.mxu0 0.0
    %796 = vmatpush1.msra.mxu0 %v89
    %797 = vmatprep.subr.mxu0 0.0
    %798 = vmatpush1.msra.mxu0 %v90
    %799 = vmatprep.subr.mxu0 0.0
    %800 = vmatpush1.msra.mxu0 0.0
    %801 = vmatprep.subr.mxu0 0.0
    %802 = vmatpush1.msra.mxu0 0.0
    %803 = vmatprep.subr.mxu0 0.0
    %804 = vmatpush1.msra.mxu0 0.0
    %805 = vmatprep.subr.mxu0 0.0
    %806 = vmatpush1.msra.mxu0 0.0
    %807 = vmatprep.subr.mxu0 0.0
    %808 = vmatpush1.msra.mxu0 0.0
    %809 = vmatprep.subr.mxu0 0.0
    %810 = vmatpush1.msra.mxu0 0.0
    %811 = vmatprep.subr.mxu0 0.0
    %812 = vmatpush1.msra.mxu0 0.0
    %813 = vmatprep.subr.mxu0 0.0
    %814 = vmatpush1.msra.mxu0 0.0
    %815 = vmatprep.subr.mxu0 0.0
    %816 = vmatpush1.msra.mxu0 0.0
    %817 = vmatprep.subr.mxu0 0.0
    %818 = vmatpush1.msra.mxu0 0.0
    %819 = vmatprep.subr.mxu0 0.0
    %820 = vmatpush1.msra.mxu0 0.0
    %821 = vmatprep.subr.mxu0 0.0
    %822 = vmatpush1.msra.mxu0 0.0
    %823 = vmatprep.subr.mxu0 0.0
    %824 = vmatpush1.msra.mxu0 0.0
    %825 = vmatprep.subr.mxu0 0.0
    %826 = vmatpush1.msra.mxu0 0.0
    %827 = vmatprep.subr.mxu0 0.0
    %828 = vmatpush1.msra.mxu0 0.0
    %829 = vmatprep.subr.mxu0 0.0
    %830 = vmatpush1.msra.mxu0 0.0
    %831 = vmatprep.subr.mxu0 0.0
    %832 = vmatpush1.msra.mxu0 0.0
    %833 = vmatprep.subr.mxu0 0.0
    %834 = vmatpush1.msra.mxu0 0.0
    %835 = vmatprep.subr.mxu0 0.0
    %836 = vmatpush1.msra.mxu0 0.0
    %837 = vmatprep.subr.mxu0 0.0
    %838 = vmatpush1.msra.mxu0 0.0
    %839 = vmatprep.subr.mxu0 0.0
    %840 = vmatpush1.msra.mxu0 0.0
    %841 = vmatprep.subr.mxu0 0.0
    %842 = vmatpush1.msra.mxu0 0.0
    %843 = vmatprep.subr.mxu0 0.0
    %844 = vmatpush1.msra.mxu0 0.0
    %845 = vmatprep.subr.mxu0 0.0
    %846 = vmatpush1.msra.mxu0 0.0
    %847 = vmatprep.subr.mxu0 0.0
    %848 = vmatpush1.msra.mxu0 0.0
    %849 = vmatprep.subr.mxu0 0.0
    %850 = vmatpush1.msra.mxu0 0.0
    %851 = vmatprep.subr.mxu0 0.0
    %852 = vmatpush1.msra.mxu0 0.0
    %853 = vmatprep.subr.mxu0 0.0
    %854 = vmatpush1.msra.mxu0 0.0
    %855 = vmatprep.mubr.f32.mxu0 0.0
    %856 = vmatmul.mubr.f32.gmra.mrb[0].mxu0 %v786
    %v857 = vpop.f32.mrb[0].mxu0
    %v858 = vadd.f32 %v103, %v857
    %v859 = vpop.f32.mrb[0].mxu0
    %860 = vmatprep.mubr.f32.mxu0 0.0
    %861 = vmatmul.mubr.f32.gmra.mrb[0].mxu0 %v789
    %v862 = vpop.f32.mrb[0].mxu0
    %v863 = vadd.f32 %v103, %v862
    %v864 = vpop.f32.mrb[0].mxu0
    %865 = vdwg.mxu0
    %866 = vst.msk [vmem:[#allocation10] sm:$0xff] %vm105, %v858
    %867 = vst.msk [vmem:[#allocation10 + $0x8] sm:$0xff] %vm105, %v863
    // Predicated region
    $region42: #{tpu_custom_call.1} parent=1 // pred_check
      _
    $region43: #{tpu_custom_call.1} parent=1 // pred_check_branch
      %869 = sbr.rel (0) target = $region45
    $region44: #{tpu_custom_call.1} parent=1 // pred_region
      %s871 = ssub.s32 256, 256
      %872 = vsyncadd [#allocation4], %s871
      %s873 = sshll.u32 [#allocation10], 4
      %s874 = int_to_ptr.vmem [resolvable:$true] %s873
      %879 = dma.vmem_to_hbm [thread:$0]  %s874, 256, %s6, [#allocation4], 128, 128, 8
    $region45: #{tpu_custom_call.1} parent=1 // pred_fallthru
      _
    // Predicated region
    $region46: #{tpu_custom_call.1} parent=1 // pred_check
      _
    $region47: #{tpu_custom_call.1} parent=1 // pred_check_branch
      %881 = sbr.rel (0) target = $region49
    $region48: #{tpu_custom_call.1} parent=1 // pred_region
      %882 = dma.done [#allocation4], 256
    $region49: #{tpu_custom_call.1} parent=1 // pred_fallthru
      _
    %883 = vsyncpa [#allocation3], 1
    %884 = vsyncpa [#allocation6], 1
    %885 = vsyncpa [#allocation9], 1
    %886 = vsyncpa [#allocation4], 1

</llo_original>
